<compile_context>
chip_gen: v5e
topology: v5e:2x2
jax: 0.10.0
libtpu: 0.0.40
codegen_flags: <defaults>
</compile_context>

<pallas_src>
import math

import jax
import jax.numpy as jnp
from jax.experimental import pallas as pl
from jax.experimental.pallas import tpu as pltpu


def _round_up(n, m):
    return ((n + m - 1) // m) * m


def _gelu_tanh(x):
    # tanh-approximate GELU: the transcendental goes to the EUP slot.
    c = 0.7978845608028654  # sqrt(2/pi)
    return 0.5 * x * (1.0 + jnp.tanh(c * (x + 0.044715 * x * x * x)))


def _dyt(x, alpha, gamma, beta):
    # DyT: tanh(alpha * x) * weight + bias   (f32, column-broadcast params)
    return jnp.tanh(alpha * x) * gamma + beta


def _const_spec(shape):
    """Grid-invariant VMEM block: DMA'd once; single-buffered when supported."""
    index_map = lambda i: (0,) * len(shape)
    try:
        return pl.BlockSpec(shape, index_map, pipeline_mode=pl.Buffered(1))
    except (AttributeError, TypeError):  # older jax without pipeline_mode
        return pl.BlockSpec(shape, index_map)


def predictor_kernel(
    scalars_ref,  # SMEM (4,)      f32: [alpha0, alpha1, alpha2, b3]
    x_ref,        # VMEM (tile_b, in_dim) f32
    w0_ref,       # (H, in_dim)    bf16   input_proj Linear   (PyTorch (out,in))
    w1_ref,       # (H, H)         bf16   layers[0] Linear
    wr_ref,       # (H, H)         bf16   ResidualBlock Linear
    w2_ref,       # (half, H)      bf16   head Linear 1
    w3_ref,       # (half, 1)      f32    head Linear 2 (column)
    vecs_ref,     # (H, 9)         f32    stacked bias / DyT gamma / DyT beta columns
    b2_ref,       # (half, 1)      f32    head Linear 1 bias (column)
    out_ref,      # (1, tile_b)    f32    lane-dense output row
):
    a0 = scalars_ref[0]
    a1 = scalars_ref[1]
    a2 = scalars_ref[2]
    b3 = scalars_ref[3]

    # Stacked (H, 1) columns: [b0, g0, bt0, b1, gr, btr, br, g2, bt2]
    b0 = vecs_ref[:, 0:1]
    g0 = vecs_ref[:, 1:2]
    bt0 = vecs_ref[:, 2:3]
    b1 = vecs_ref[:, 3:4]
    gr = vecs_ref[:, 4:5]
    btr = vecs_ref[:, 5:6]
    br = vecs_ref[:, 6:7]
    g2 = vecs_ref[:, 7:8]
    bt2 = vecs_ref[:, 8:9]

    # In-kernel cast (free VPU slot); batch rides the lane axis from here on.
    x_bf = x_ref[...].astype(jnp.bfloat16)                      # (tile_b, in_dim)

    # ---- input_proj: Linear -> GELU -> (Dropout = identity) ----
    h = jnp.dot(w0_ref[...], x_bf.T,                            # (H, tile_b)
                preferred_element_type=jnp.float32) + b0
    h = _gelu_tanh(h)

    # ---- layers[0]: DyT -> Linear -> GELU -> Dropout ----
    t0 = _dyt(h, a0, g0, bt0).astype(jnp.bfloat16)
    h = _gelu_tanh(
        jnp.dot(w1_ref[...], t0, preferred_element_type=jnp.float32) + b1)

    # ---- layers[1]: ResidualBlock (x + DyT -> Linear -> GELU -> Dropout) ----
    tr = _dyt(h, a1, gr, btr).astype(jnp.bfloat16)
    h = h + _gelu_tanh(
        jnp.dot(wr_ref[...], tr, preferred_element_type=jnp.float32) + br)

    # ---- layers[-1]: DyT -> Linear(H, H//2) -> GELU -> Dropout -> Linear(H//2, 1) ----
    t2 = _dyt(h, a2, g2, bt2).astype(jnp.bfloat16)
    h2 = _gelu_tanh(
        jnp.dot(w2_ref[...], t2, preferred_element_type=jnp.float32) + b2_ref[...])

    # Final Linear(half, 1): VPU multiply + sublane reduce (no N=1 MXU matmul).
    out_ref[...] = jnp.sum(h2 * w3_ref[...], axis=0, keepdims=True) + b3


def enhanced_distance_predictor(x, params, *, tile_b=512):
    """x: (B, 2*node_dim) float32. Returns (B,) float32.

    tile_b: batch rows per grid step (lane axis => rounded to a multiple of
    128).  Default 512 is v7x-safe (64 MiB VMEM); sweep up to 1024-2048 on
    v5e/v6e (128 MiB parts).
    """
    B, in_dim = x.shape
    H = params["w1"].shape[0]
    half = params["w2"].shape[0]

    # Lane-dense batch tiles: multiples of 128, capped near the batch size.
    tile_b = max(128, _round_up(min(int(tile_b), max(B, 1)), 128))
    # v7x shards the "parallel" batch axis over 2 TensorCores; prefer >= 2 tiles.
    if pl.cdiv(B, tile_b) == 1 and B > 256:
        tile_b = _round_up(pl.cdiv(B, 2), 128)
    num_tiles = pl.cdiv(B, tile_b)

    # Weight-only dtype prep (one-off, tiny; x itself streams in native f32).
    w0 = params["w0"].astype(jnp.bfloat16)   # (H, in_dim)
    w1 = params["w1"].astype(jnp.bfloat16)   # (H, H)
    wr = params["wr"].astype(jnp.bfloat16)   # (H, H)
    w2 = params["w2"].astype(jnp.bfloat16)   # (half, H)
    w3c = params["w3"].reshape(half, 1).astype(jnp.float32)
    b2c = params["b2"].reshape(half, 1).astype(jnp.float32)

    # DyT alphas + final scalar bias -> SMEM (regular input, no scalar prefetch).
    scalars = jnp.concatenate(
        [params["alphas"].astype(jnp.float32),
         params["b3"].reshape(-1).astype(jnp.float32)])          # (4,)

    # All per-feature bias / DyT gamma / DyT beta vectors as one (H, 9) array of
    # columns: a single DMA, VMEM-resident across the grid.
    col = lambda v: v.reshape(H, 1).astype(jnp.float32)
    vecs = jnp.concatenate(
        [col(params["b0"]), col(params["g0"]), col(params["bt0"]),
         col(params["b1"]), col(params["gr"]), col(params["btr"]),
         col(params["br"]), col(params["g2"]), col(params["bt2"])],
        axis=1)                                                   # (H, 9)

    cost = pl.CostEstimate(
        flops=2 * B * (in_dim * H + 2 * H * H + H * half + half),
        transcendentals=B * (6 * H + half),
        bytes_accessed=B * (4 * in_dim + 4)
        + 2 * (in_dim * H + 2 * H * H + H * half)
        + 4 * (9 * H + 2 * half + 4),
    )

    out = pl.pallas_call(
        predictor_kernel,
        out_shape=jax.ShapeDtypeStruct((1, num_tiles * tile_b), jnp.float32),
        grid=(num_tiles,),
        in_specs=[
            pl.BlockSpec(memory_space=pltpu.MemorySpace.SMEM),   # scalars
            pl.BlockSpec((tile_b, in_dim), lambda i: (i, 0)),    # x tile (f32)
            _const_spec((H, in_dim)),                            # w0
            _const_spec((H, H)),                                 # w1
            _const_spec((H, H)),                                 # wr
            _const_spec((half, H)),                              # w2
            _const_spec((half, 1)),                              # w3 column
            _const_spec((H, 9)),                                 # stacked vecs
            _const_spec((half, 1)),                              # b2 column
        ],
        out_specs=pl.BlockSpec((1, tile_b), lambda i: (0, i)),   # lane-dense row
        compiler_params=pltpu.CompilerParams(
            dimension_semantics=("parallel",),     # v7x: shard batch over 2 TCs
            vmem_limit_bytes=32 * 1024 * 1024,     # explicit budget: ok on v5e/v6e/v7x
        ),
        cost_estimate=cost,
    )(scalars, x, w0, w1, wr, w2, w3c, vecs, b2c)

    return out[0, :B]  # .squeeze(-1)


def init_params(key, node_dim, hidden_dim):
    """Deterministic synthetic params matching the PyTorch module's shapes.

    Linear weights use PyTorch layout (out_features, in_features).
    """
    in_dim = node_dim * 2
    half = hidden_dim // 2
    ks = jax.random.split(key, 5)

    def lin(k, fan_in, fan_out):
        bound = 1.0 / math.sqrt(fan_in)
        kw, kb = jax.random.split(k)
        w = jax.random.uniform(kw, (fan_out, fan_in), jnp.float32, -bound, bound)
        b = jax.random.uniform(kb, (fan_out,), jnp.float32, -bound, bound)
        return w, b

    w0, b0 = lin(ks[0], in_dim, hidden_dim)       # input_proj
    w1, b1 = lin(ks[1], hidden_dim, hidden_dim)   # layers[0]
    wr, br = lin(ks[2], hidden_dim, hidden_dim)   # residual block
    w2, b2 = lin(ks[3], hidden_dim, half)         # head linear 1
    w3, b3 = lin(ks[4], half, 1)                  # head linear 2

    # DyT params (PyTorch init: alpha=0.5, weight=1, bias=0)
    alphas = jnp.array([0.5, 0.5, 0.5], dtype=jnp.float32)
    ones = jnp.ones((hidden_dim,), jnp.float32)
    zeros = jnp.zeros((hidden_dim,), jnp.float32)

    return dict(
        alphas=alphas,
        w0=w0, b0=b0,
        g0=ones, bt0=zeros, w1=w1, b1=b1,
        gr=ones, btr=zeros, wr=wr, br=br,
        g2=ones, bt2=zeros, w2=w2, b2=b2,
        w3=w3, b3=b3,
    )


def reference_forward(x, p):
    """Pure-JAX reference, PyTorch semantics (f32, exact erf GELU, eval mode)."""
    def gelu(v):
        return 0.5 * v * (1.0 + jax.lax.erf(v * 0.7071067811865476))

    def dyt(v, a, g, b):
        return jnp.tanh(a * v) * g + b

    h = gelu(x @ p["w0"].T + p["b0"])
    h = gelu(dyt(h, p["alphas"][0], p["g0"], p["bt0"]) @ p["w1"].T + p["b1"])
    h = h + gelu(dyt(h, p["alphas"][1], p["gr"], p["btr"]) @ p["wr"].T + p["br"])
    h2 = gelu(dyt(h, p["alphas"][2], p["g2"], p["bt2"]) @ p["w2"].T + p["b2"])
    return (h2 @ p["w3"].T + p["b3"])[:, 0]


def reference_forward_matched(x, p):
    """Reference matching the kernel's numerics (bf16 matmul inputs, tanh GELU)."""
    def gelu(v):
        c = 0.7978845608028654
        return 0.5 * v * (1.0 + jnp.tanh(c * (v + 0.044715 * v * v * v)))

    def dyt(v, a, g, b):
        return jnp.tanh(a * v) * g + b

    bf = lambda a: a.astype(jnp.bfloat16)
    f32 = jnp.float32
    h = gelu(jnp.dot(bf(x), bf(p["w0"]).T, preferred_element_type=f32) + p["b0"])
    h = gelu(jnp.dot(bf(dyt(h, p["alphas"][0], p["g0"], p["bt0"])), bf(p["w1"]).T,
                     preferred_element_type=f32) + p["b1"])
    h = h + gelu(jnp.dot(bf(dyt(h, p["alphas"][1], p["gr"], p["btr"])), bf(p["wr"]).T,
                         preferred_element_type=f32) + p["br"])
    h2 = gelu(jnp.dot(bf(dyt(h, p["alphas"][2], p["g2"], p["bt2"])), bf(p["w2"]).T,
                      preferred_element_type=f32) + p["b2"])
    return (jnp.dot(h2, p["w3"].T, preferred_element_type=f32) + p["b3"])[:, 0]


if __name__ == "__main__":
    node_dim = 16
    hidden_dim = 32
    batch = 200   # deliberately not a multiple of tile_b: exercises the ragged last block

    key = jax.random.PRNGKey(0)
    kx, kp = jax.random.split(key)
    x = jax.random.normal(kx, (batch, node_dim * 2), dtype=jnp.float32)
    params = init_params(kp, node_dim, hidden_dim)

    # tile_b=128 -> a 2-step grid with a ragged final tile at this small test
    # size; use the default (512) for production batch sizes.
    out = enhanced_distance_predictor(x, params, tile_b=128)
    out = jax.block_until_ready(out)
    assert out.shape == (batch,)

    ref_matched = reference_forward_matched(x, params)
    ref_exact = reference_forward(x, params)
    err_m = float(jnp.max(jnp.abs(out - ref_matched)))
    err_e = float(jnp.max(jnp.abs(out - ref_exact)))
    assert err_m < 5e-3, f"vs matched (bf16/tanh-GELU) ref, max abs diff = {err_m}"
    assert err_e < 5e-2, f"vs exact f32 erf-GELU ref, max abs diff = {err_e}"

    print("KERNEL_OK")
</pallas_src>

<mosaic_0001>
module attributes {stable_mosaic.version = 11 : i64} {
  func.func @predictor_kernel(%arg0: i32, %arg1: memref<4xf32, #tpu.memory_space<smem>>, %arg2: memref<128x32xf32, #tpu.memory_space<vmem>>, %arg3: memref<32x32xbf16, #tpu.memory_space<vmem>>, %arg4: memref<32x32xbf16, #tpu.memory_space<vmem>>, %arg5: memref<32x32xbf16, #tpu.memory_space<vmem>>, %arg6: memref<16x32xbf16, #tpu.memory_space<vmem>>, %arg7: memref<16x1xf32, #tpu.memory_space<vmem>>, %arg8: memref<32x9xf32, #tpu.memory_space<vmem>>, %arg9: memref<16x1xf32, #tpu.memory_space<vmem>>, %arg10: memref<1x128xf32, #tpu.memory_space<vmem>>) attributes {dimension_semantics = [#tpu.dimension_semantics<parallel>], iteration_bounds = array<i64: 2>, scalar_prefetch = 0 : i64, scratch_operands = 0 : i64, tpu.core_type = #tpu.core_type<tc>, window_params = [{transform_indices = @transform_0, window_bounds = array<i64: 4>}, {transform_indices = @transform_1, window_bounds = array<i64: 128, 32>}, {pipeline_mode = #tpu.pipeline_mode<synchronous>, transform_indices = @transform_2, window_bounds = array<i64: 32, 32>}, {pipeline_mode = #tpu.pipeline_mode<synchronous>, transform_indices = @transform_3, window_bounds = array<i64: 32, 32>}, {pipeline_mode = #tpu.pipeline_mode<synchronous>, transform_indices = @transform_4, window_bounds = array<i64: 32, 32>}, {pipeline_mode = #tpu.pipeline_mode<synchronous>, transform_indices = @transform_5, window_bounds = array<i64: 16, 32>}, {pipeline_mode = #tpu.pipeline_mode<synchronous>, transform_indices = @transform_6, window_bounds = array<i64: 16, 1>}, {pipeline_mode = #tpu.pipeline_mode<synchronous>, transform_indices = @transform_7, window_bounds = array<i64: 32, 9>}, {pipeline_mode = #tpu.pipeline_mode<synchronous>, transform_indices = @transform_8, window_bounds = array<i64: 16, 1>}, {transform_indices = @transform_9, window_bounds = array<i64: 1, 128>}]} {
    %c0 = arith.constant 0 : index
    %0 = memref.load %arg1[%c0] : memref<4xf32, #tpu.memory_space<smem>>
    %c1 = arith.constant 1 : index
    %1 = memref.load %arg1[%c1] : memref<4xf32, #tpu.memory_space<smem>>
    %c2 = arith.constant 2 : index
    %2 = memref.load %arg1[%c2] : memref<4xf32, #tpu.memory_space<smem>>
    %c3 = arith.constant 3 : index
    %3 = memref.load %arg1[%c3] : memref<4xf32, #tpu.memory_space<smem>>
    %c0_0 = arith.constant 0 : index
    %c0_1 = arith.constant 0 : index
    %4 = vector.load %arg8[%c0_0, %c0_1] : memref<32x9xf32, #tpu.memory_space<vmem>>, vector<32x1xf32>
    %c0_2 = arith.constant 0 : index
    %c1_3 = arith.constant 1 : index
    %5 = vector.load %arg8[%c0_2, %c1_3] : memref<32x9xf32, #tpu.memory_space<vmem>>, vector<32x1xf32>
    %c0_4 = arith.constant 0 : index
    %c2_5 = arith.constant 2 : index
    %6 = vector.load %arg8[%c0_4, %c2_5] : memref<32x9xf32, #tpu.memory_space<vmem>>, vector<32x1xf32>
    %c0_6 = arith.constant 0 : index
    %c3_7 = arith.constant 3 : index
    %7 = vector.load %arg8[%c0_6, %c3_7] : memref<32x9xf32, #tpu.memory_space<vmem>>, vector<32x1xf32>
    %c0_8 = arith.constant 0 : index
    %c4 = arith.constant 4 : index
    %8 = vector.load %arg8[%c0_8, %c4] : memref<32x9xf32, #tpu.memory_space<vmem>>, vector<32x1xf32>
    %c0_9 = arith.constant 0 : index
    %c5 = arith.constant 5 : index
    %9 = vector.load %arg8[%c0_9, %c5] : memref<32x9xf32, #tpu.memory_space<vmem>>, vector<32x1xf32>
    %c0_10 = arith.constant 0 : index
    %c6 = arith.constant 6 : index
    %10 = vector.load %arg8[%c0_10, %c6] : memref<32x9xf32, #tpu.memory_space<vmem>>, vector<32x1xf32>
    %c0_11 = arith.constant 0 : index
    %c7 = arith.constant 7 : index
    %11 = vector.load %arg8[%c0_11, %c7] : memref<32x9xf32, #tpu.memory_space<vmem>>, vector<32x1xf32>
    %c0_12 = arith.constant 0 : index
    %c8 = arith.constant 8 : index
    %12 = vector.load %arg8[%c0_12, %c8] : memref<32x9xf32, #tpu.memory_space<vmem>>, vector<32x1xf32>
    %c0_13 = arith.constant 0 : index
    %c0_14 = arith.constant 0 : index
    %13 = vector.load %arg2[%c0_13, %c0_14] : memref<128x32xf32, #tpu.memory_space<vmem>>, vector<128x32xf32>
    %14 = arith.truncf %13 : vector<128x32xf32> to vector<128x32xbf16>
    %c0_15 = arith.constant 0 : index
    %c0_16 = arith.constant 0 : index
    %15 = vector.load %arg3[%c0_15, %c0_16] : memref<32x32xbf16, #tpu.memory_space<vmem>>, vector<32x32xbf16>
    %16 = tpu.transpose %14, [1, 0] : vector<128x32xbf16> -> vector<32x128xbf16>
    %cst = arith.constant dense<0.000000e+00> : vector<32x128xf32>
    %17 = tpu.matmul %15, %16, %cst {dimension_numbers = #tpu.dot_dimension_numbers<[1], [0], [0], [1], [0, 0, 1, 1], [], []>} : vector<32x32xbf16>, vector<32x128xbf16>, vector<32x128xf32> -> vector<32x128xf32>
    %18 = vector.broadcast %4 : vector<32x1xf32> to vector<32x128xf32>
    %19 = arith.addf %17, %18 : vector<32x128xf32>
    %cst_17 = arith.constant 5.000000e-01 : f32
    %20 = vector.broadcast %cst_17 : f32 to vector<32x128xf32>
    %21 = arith.mulf %20, %19 : vector<32x128xf32>
    %cst_18 = arith.constant 4.471500e-02 : f32
    %22 = vector.broadcast %cst_18 : f32 to vector<32x128xf32>
    %23 = arith.mulf %22, %19 : vector<32x128xf32>
    %24 = arith.mulf %23, %19 : vector<32x128xf32>
    %25 = arith.mulf %24, %19 : vector<32x128xf32>
    %26 = arith.addf %19, %25 : vector<32x128xf32>
    %cst_19 = arith.constant 0.797884583 : f32
    %27 = vector.broadcast %cst_19 : f32 to vector<32x128xf32>
    %28 = arith.mulf %27, %26 : vector<32x128xf32>
    %29 = math.tanh %28 : vector<32x128xf32>
    %cst_20 = arith.constant 1.000000e+00 : f32
    %30 = vector.broadcast %cst_20 : f32 to vector<32x128xf32>
    %31 = arith.addf %30, %29 : vector<32x128xf32>
    %32 = arith.mulf %21, %31 : vector<32x128xf32>
    %33 = vector.broadcast %0 : f32 to vector<32x128xf32>
    %34 = arith.mulf %33, %32 : vector<32x128xf32>
    %35 = math.tanh %34 : vector<32x128xf32>
    %36 = vector.broadcast %5 : vector<32x1xf32> to vector<32x128xf32>
    %37 = arith.mulf %35, %36 : vector<32x128xf32>
    %38 = vector.broadcast %6 : vector<32x1xf32> to vector<32x128xf32>
    %39 = arith.addf %37, %38 : vector<32x128xf32>
    %40 = arith.truncf %39 : vector<32x128xf32> to vector<32x128xbf16>
    %c0_21 = arith.constant 0 : index
    %c0_22 = arith.constant 0 : index
    %41 = vector.load %arg4[%c0_21, %c0_22] : memref<32x32xbf16, #tpu.memory_space<vmem>>, vector<32x32xbf16>
    %cst_23 = arith.constant dense<0.000000e+00> : vector<32x128xf32>
    %42 = tpu.matmul %41, %40, %cst_23 {dimension_numbers = #tpu.dot_dimension_numbers<[1], [0], [0], [1], [0, 0, 1, 1], [], []>} : vector<32x32xbf16>, vector<32x128xbf16>, vector<32x128xf32> -> vector<32x128xf32>
    %43 = vector.broadcast %7 : vector<32x1xf32> to vector<32x128xf32>
    %44 = arith.addf %42, %43 : vector<32x128xf32>
    %cst_24 = arith.constant 5.000000e-01 : f32
    %45 = vector.broadcast %cst_24 : f32 to vector<32x128xf32>
    %46 = arith.mulf %45, %44 : vector<32x128xf32>
    %cst_25 = arith.constant 4.471500e-02 : f32
    %47 = vector.broadcast %cst_25 : f32 to vector<32x128xf32>
    %48 = arith.mulf %47, %44 : vector<32x128xf32>
    %49 = arith.mulf %48, %44 : vector<32x128xf32>
    %50 = arith.mulf %49, %44 : vector<32x128xf32>
    %51 = arith.addf %44, %50 : vector<32x128xf32>
    %cst_26 = arith.constant 0.797884583 : f32
    %52 = vector.broadcast %cst_26 : f32 to vector<32x128xf32>
    %53 = arith.mulf %52, %51 : vector<32x128xf32>
    %54 = math.tanh %53 : vector<32x128xf32>
    %cst_27 = arith.constant 1.000000e+00 : f32
    %55 = vector.broadcast %cst_27 : f32 to vector<32x128xf32>
    %56 = arith.addf %55, %54 : vector<32x128xf32>
    %57 = arith.mulf %46, %56 : vector<32x128xf32>
    %58 = vector.broadcast %1 : f32 to vector<32x128xf32>
    %59 = arith.mulf %58, %57 : vector<32x128xf32>
    %60 = math.tanh %59 : vector<32x128xf32>
    %61 = vector.broadcast %8 : vector<32x1xf32> to vector<32x128xf32>
    %62 = arith.mulf %60, %61 : vector<32x128xf32>
    %63 = vector.broadcast %9 : vector<32x1xf32> to vector<32x128xf32>
    %64 = arith.addf %62, %63 : vector<32x128xf32>
    %65 = arith.truncf %64 : vector<32x128xf32> to vector<32x128xbf16>
    %c0_28 = arith.constant 0 : index
    %c0_29 = arith.constant 0 : index
    %66 = vector.load %arg5[%c0_28, %c0_29] : memref<32x32xbf16, #tpu.memory_space<vmem>>, vector<32x32xbf16>
    %cst_30 = arith.constant dense<0.000000e+00> : vector<32x128xf32>
    %67 = tpu.matmul %66, %65, %cst_30 {dimension_numbers = #tpu.dot_dimension_numbers<[1], [0], [0], [1], [0, 0, 1, 1], [], []>} : vector<32x32xbf16>, vector<32x128xbf16>, vector<32x128xf32> -> vector<32x128xf32>
    %68 = vector.broadcast %10 : vector<32x1xf32> to vector<32x128xf32>
    %69 = arith.addf %67, %68 : vector<32x128xf32>
    %cst_31 = arith.constant 5.000000e-01 : f32
    %70 = vector.broadcast %cst_31 : f32 to vector<32x128xf32>
    %71 = arith.mulf %70, %69 : vector<32x128xf32>
    %cst_32 = arith.constant 4.471500e-02 : f32
    %72 = vector.broadcast %cst_32 : f32 to vector<32x128xf32>
    %73 = arith.mulf %72, %69 : vector<32x128xf32>
    %74 = arith.mulf %73, %69 : vector<32x128xf32>
    %75 = arith.mulf %74, %69 : vector<32x128xf32>
    %76 = arith.addf %69, %75 : vector<32x128xf32>
    %cst_33 = arith.constant 0.797884583 : f32
    %77 = vector.broadcast %cst_33 : f32 to vector<32x128xf32>
    %78 = arith.mulf %77, %76 : vector<32x128xf32>
    %79 = math.tanh %78 : vector<32x128xf32>
    %cst_34 = arith.constant 1.000000e+00 : f32
    %80 = vector.broadcast %cst_34 : f32 to vector<32x128xf32>
    %81 = arith.addf %80, %79 : vector<32x128xf32>
    %82 = arith.mulf %71, %81 : vector<32x128xf32>
    %83 = arith.addf %57, %82 : vector<32x128xf32>
    %84 = vector.broadcast %2 : f32 to vector<32x128xf32>
    %85 = arith.mulf %84, %83 : vector<32x128xf32>
    %86 = math.tanh %85 : vector<32x128xf32>
    %87 = vector.broadcast %11 : vector<32x1xf32> to vector<32x128xf32>
    %88 = arith.mulf %86, %87 : vector<32x128xf32>
    %89 = vector.broadcast %12 : vector<32x1xf32> to vector<32x128xf32>
    %90 = arith.addf %88, %89 : vector<32x128xf32>
    %91 = arith.truncf %90 : vector<32x128xf32> to vector<32x128xbf16>
    %c0_35 = arith.constant 0 : index
    %c0_36 = arith.constant 0 : index
    %92 = vector.load %arg6[%c0_35, %c0_36] : memref<16x32xbf16, #tpu.memory_space<vmem>>, vector<16x32xbf16>
    %cst_37 = arith.constant dense<0.000000e+00> : vector<16x128xf32>
    %93 = tpu.matmul %92, %91, %cst_37 {dimension_numbers = #tpu.dot_dimension_numbers<[1], [0], [0], [1], [0, 0, 1, 1], [], []>} : vector<16x32xbf16>, vector<32x128xbf16>, vector<16x128xf32> -> vector<16x128xf32>
    %c0_38 = arith.constant 0 : index
    %c0_39 = arith.constant 0 : index
    %94 = vector.load %arg9[%c0_38, %c0_39] : memref<16x1xf32, #tpu.memory_space<vmem>>, vector<16x1xf32>
    %95 = vector.broadcast %94 : vector<16x1xf32> to vector<16x128xf32>
    %96 = arith.addf %93, %95 : vector<16x128xf32>
    %cst_40 = arith.constant 5.000000e-01 : f32
    %97 = vector.broadcast %cst_40 : f32 to vector<16x128xf32>
    %98 = arith.mulf %97, %96 : vector<16x128xf32>
    %cst_41 = arith.constant 4.471500e-02 : f32
    %99 = vector.broadcast %cst_41 : f32 to vector<16x128xf32>
    %100 = arith.mulf %99, %96 : vector<16x128xf32>
    %101 = arith.mulf %100, %96 : vector<16x128xf32>
    %102 = arith.mulf %101, %96 : vector<16x128xf32>
    %103 = arith.addf %96, %102 : vector<16x128xf32>
    %cst_42 = arith.constant 0.797884583 : f32
    %104 = vector.broadcast %cst_42 : f32 to vector<16x128xf32>
    %105 = arith.mulf %104, %103 : vector<16x128xf32>
    %106 = math.tanh %105 : vector<16x128xf32>
    %cst_43 = arith.constant 1.000000e+00 : f32
    %107 = vector.broadcast %cst_43 : f32 to vector<16x128xf32>
    %108 = arith.addf %107, %106 : vector<16x128xf32>
    %109 = arith.mulf %98, %108 : vector<16x128xf32>
    %c0_44 = arith.constant 0 : index
    %c0_45 = arith.constant 0 : index
    %110 = vector.load %arg7[%c0_44, %c0_45] : memref<16x1xf32, #tpu.memory_space<vmem>>, vector<16x1xf32>
    %111 = vector.broadcast %110 : vector<16x1xf32> to vector<16x128xf32>
    %112 = arith.mulf %109, %111 : vector<16x128xf32>
    %cst_46 = arith.constant dense<0.000000e+00> : vector<128xf32>
    %113 = vector.multi_reduction <add>, %112, %cst_46 [0] : vector<16x128xf32> to vector<128xf32>
    %114 = vector.shape_cast %113 : vector<128xf32> to vector<1x128xf32>
    %115 = vector.broadcast %3 : f32 to vector<1x128xf32>
    %116 = arith.addf %114, %115 : vector<1x128xf32>
    %c0_47 = arith.constant 0 : index
    %c0_48 = arith.constant 0 : index
    %117 = vector.load %arg10[%c0_47, %c0_48] : memref<1x128xf32, #tpu.memory_space<vmem>>, vector<1x128xf32>
    tpu.vector_store %arg10[%c0_47, %c0_48], %116 {strides = array<i32>} : memref<1x128xf32, #tpu.memory_space<vmem>>, vector<1x128xf32>,
    return
  }
  func.func @transform_0(%arg0: i32) -> i32 {
    %c0_i32 = arith.constant 0 : i32
    %c0_i32_0 = arith.constant 0 : i32
    return %c0_i32 : i32
  }
  func.func @transform_1(%arg0: i32) -> (i32, i32) {
    %c0_i32 = arith.constant 0 : i32
    %c0_i32_0 = arith.constant 0 : i32
    return %arg0, %c0_i32 : i32, i32
  }
  func.func @transform_2(%arg0: i32) -> (i32, i32) {
    %c0_i32 = arith.constant 0 : i32
    %c0_i32_0 = arith.constant 0 : i32
    %c0_i32_1 = arith.constant 0 : i32
    return %c0_i32, %c0_i32_0 : i32, i32
  }
  func.func @transform_3(%arg0: i32) -> (i32, i32) {
    %c0_i32 = arith.constant 0 : i32
    %c0_i32_0 = arith.constant 0 : i32
    %c0_i32_1 = arith.constant 0 : i32
    return %c0_i32, %c0_i32_0 : i32, i32
  }
  func.func @transform_4(%arg0: i32) -> (i32, i32) {
    %c0_i32 = arith.constant 0 : i32
    %c0_i32_0 = arith.constant 0 : i32
    %c0_i32_1 = arith.constant 0 : i32
    return %c0_i32, %c0_i32_0 : i32, i32
  }
  func.func @transform_5(%arg0: i32) -> (i32, i32) {
    %c0_i32 = arith.constant 0 : i32
    %c0_i32_0 = arith.constant 0 : i32
    %c0_i32_1 = arith.constant 0 : i32
    return %c0_i32, %c0_i32_0 : i32, i32
  }
  func.func @transform_6(%arg0: i32) -> (i32, i32) {
    %c0_i32 = arith.constant 0 : i32
    %c0_i32_0 = arith.constant 0 : i32
    %c0_i32_1 = arith.constant 0 : i32
    return %c0_i32, %c0_i32_0 : i32, i32
  }
  func.func @transform_7(%arg0: i32) -> (i32, i32) {
    %c0_i32 = arith.constant 0 : i32
    %c0_i32_0 = arith.constant 0 : i32
    %c0_i32_1 = arith.constant 0 : i32
    return %c0_i32, %c0_i32_0 : i32, i32
  }
  func.func @transform_8(%arg0: i32) -> (i32, i32) {
    %c0_i32 = arith.constant 0 : i32
    %c0_i32_0 = arith.constant 0 : i32
    %c0_i32_1 = arith.constant 0 : i32
    return %c0_i32, %c0_i32_0 : i32, i32
  }
  func.func @transform_9(%arg0: i32) -> (i32, i32) {
    %c0_i32 = arith.constant 0 : i32
    %c0_i32_0 = arith.constant 0 : i32
    return %c0_i32, %arg0 : i32, i32
  }
}

</mosaic_0001>

<llo_original>
// kernel: tpu_custom_call.1
$region0: #{tpu_custom_call.1}
  #allocation0 [shape = 'u32[]', space=smem, size = 0x4, offset = 0x4, fixed_abs, tag = 'smem constant byte address 0x4 - core index']
  #allocation1 [shape = 'u32[72,128]{1,0:T(1,128)}', space=vmem, size = 0x9000, scoped, tag = 'internal scratch']
  %s0 = inlined_call_operand.vmem [shape: f32[4], index: 0, kind: input, shape index: {}]
  %s1 = inlined_call_operand.vmem [shape: f32[200,32], index: 1, kind: input, shape index: {}]
  %s2 = inlined_call_operand.vmem [shape: bf16[32,32], index: 2, kind: input, shape index: {}]
  %s3 = inlined_call_operand.vmem [shape: bf16[32,32], index: 3, kind: input, shape index: {}]
  %s4 = inlined_call_operand.vmem [shape: bf16[32,32], index: 4, kind: input, shape index: {}]
  %s5 = inlined_call_operand.vmem [shape: bf16[16,32], index: 5, kind: input, shape index: {}]
  %s6 = inlined_call_operand.vmem [shape: f32[16,1], index: 6, kind: input, shape index: {}]
  %s7 = inlined_call_operand.vmem [shape: f32[32,9], index: 7, kind: input, shape index: {}]
  %s8 = inlined_call_operand.vmem [shape: f32[16,1], index: 8, kind: input, shape index: {}]
  %s9 = inlined_call_operand.hbm [shape: f32[1,256], index: 9, kind: output, shape index: {}]
  %s10 = sld [smem:[#allocation0]]
  $region73: #{tpu_custom_call.1} parent=0
    _
  %s12 = ssub.s32 1, %s10
  %s13 = scalar_select 0, %s12, %s10
  $region1: #{tpu_custom_call.1} parent=0
    #allocation2 [shape = 'u8[512]{0}', space=smem, size = 0x200, scoped, tag = 'input window, operand 0, single buffered']
    #allocation3 [shape = 's32[2]{0}', space=sflag, size = 0x8, scoped, tag = 'scoped memory for tpu_custom_call.1']
    #allocation4 [shape = 's32[2]{0}', space=sflag, size = 0x8, scoped, tag = 'scoped memory for tpu_custom_call.1']
    #allocation5 [shape = 'u8[1024]{0}', space=vmem, size = 0x400, scoped, tag = 'output window, operand 0']
    %14 = vsyncpa [#allocation4], 0
    %15 = vsyncpa [#allocation3], 0
    %s16 = scalar_lea.sflag [#allocation3], 1
    %17 = vsyncpa %s16, 0
    loop: start=0, step=1, limit=4
    $region2: #{tpu_custom_call.1} parent=1 // loop_pre_header
      _
    $region3: #{tpu_custom_call.1} parent=1 // loop_header
      %s19 = sphi 0, %s23
      %p20 = scmp.ge.s32.totalorder %s19, 4
      %s27 = sphi 0, %s27
      %s29 = sphi 0, %s27
      %s30 = sphi 0, %s29
      %s44 = sphi 0, %s30
      %s50 = sphi 0, %s52
      %s53 = sphi 0, %s50
      %s54 = sphi 0, %s53
      %s70 = sphi 0, %s54
      %s74 = sphi 0, %s74
      %s76 = sphi 0, %s74
      %s77 = sphi 0, %s76
      %s91 = sphi 0, %s77
      %s95 = sphi 0, %s95
      %s97 = sphi 0, %s95
      %s98 = sphi 0, %s97
      %s112 = sphi 0, %s98
      %s116 = sphi 0, %s116
      %s118 = sphi 0, %s116
      %s119 = sphi 0, %s118
      %s133 = sphi 0, %s119
      %s137 = sphi 0, %s137
      %s139 = sphi 0, %s137
      %s140 = sphi 0, %s139
      %s154 = sphi 0, %s140
      %s158 = sphi 0, %s158
      %s160 = sphi 0, %s158
      %s161 = sphi 0, %s160
      %s175 = sphi 0, %s161
      %s179 = sphi 0, %s179
      %s181 = sphi 0, %s179
      %s182 = sphi 0, %s181
      %s196 = sphi 0, %s182
      %s200 = sphi 0, %s200
      %s202 = sphi 0, %s200
      %s203 = sphi 0, %s202
      %s217 = sphi 0, %s203
      %s223 = sphi 0, %s225
      %s226 = sphi 0, %s223
      %s227 = sphi 0, %s226
      %s243 = sphi 0, %s227
    $region4: #{tpu_custom_call.1} parent=1 // loop_header_branch
      %22 = sbr.rel (%p20) target = $region8
    $region5: #{tpu_custom_call.1} parent=1 // loop_body
      %s24 = ssub.s32 %s19, 1
      %s25 = ssub.s32 %s19, 2
      %s26 = sadd.s32 %s19, 1
      %s28 = sadd.s32 %s27, 1
      %p31 = scmp.eq.s32.totalorder %s19, 1
      %p32 = scmp.ne.s32.totalorder %s27, %s29
      %p33 = scmp.eq.s32.totalorder %s19, 0
      %p34 = por %p32, %p33
      %p35 = scmp.ne.s32.totalorder %s27, %s29
      %p36 = scmp.eq.s32.totalorder %s24, 1
      %p37 = por %p35, %p36
      %p38 = scmp.ne.s32.totalorder %s29, %s30
      %p39 = scmp.eq.s32.totalorder %s24, 0
      %p40 = por %p38, %p39
      %p41 = scmp.ne.s32.totalorder %s29, %s30
      %p42 = scmp.eq.s32.totalorder %s25, 1
      %p43 = por %p41, %p42
      %p45 = scmp.ne.s32.totalorder %s30, %s44
      %p46 = scmp.eq.s32.totalorder %s25, 0
      %p47 = por %p45, %p46
      %s48 = ssub.s32 %s19, %s26
      %p49 = scmp.eq.s32.totalorder %s48, 0
      %s51 = sadd.s32 %s50, 1
      %s52 = scalar_select %p49, %s50, %s51
      %p55 = pneg %p49
      %p56 = scmp.eq.s32.totalorder %s19, 1
      %p57 = por %p55, %p56
      %p58 = scmp.ne.s32.totalorder %s50, %s53
      %p59 = scmp.eq.s32.totalorder %s19, 0
      %p60 = por %p58, %p59
      %p61 = scmp.ne.s32.totalorder %s50, %s53
      %p62 = scmp.eq.s32.totalorder %s24, 1
      %p63 = por %p61, %p62
      %p64 = scmp.ne.s32.totalorder %s53, %s54
      %p65 = scmp.eq.s32.totalorder %s24, 0
      %p66 = por %p64, %p65
      %p67 = scmp.ne.s32.totalorder %s53, %s54
      %p68 = scmp.eq.s32.totalorder %s25, 1
      %p69 = por %p67, %p68
      %p71 = scmp.ne.s32.totalorder %s54, %s70
      %p72 = scmp.eq.s32.totalorder %s25, 0
      %p73 = por %p71, %p72
      %s75 = sadd.s32 %s74, 1
      %p78 = scmp.eq.s32.totalorder %s19, 1
      %p79 = scmp.ne.s32.totalorder %s74, %s76
      %p80 = scmp.eq.s32.totalorder %s19, 0
      %p81 = por %p79, %p80
      %p82 = scmp.ne.s32.totalorder %s74, %s76
      %p83 = scmp.eq.s32.totalorder %s24, 1
      %p84 = por %p82, %p83
      %p85 = scmp.ne.s32.totalorder %s76, %s77
      %p86 = scmp.eq.s32.totalorder %s24, 0
      %p87 = por %p85, %p86
      %p88 = scmp.ne.s32.totalorder %s76, %s77
      %p89 = scmp.eq.s32.totalorder %s25, 1
      %p90 = por %p88, %p89
      %p92 = scmp.ne.s32.totalorder %s77, %s91
      %p93 = scmp.eq.s32.totalorder %s25, 0
      %p94 = por %p92, %p93
      %s96 = sadd.s32 %s95, 1
      %p99 = scmp.eq.s32.totalorder %s19, 1
      %p100 = scmp.ne.s32.totalorder %s95, %s97
      %p101 = scmp.eq.s32.totalorder %s19, 0
      %p102 = por %p100, %p101
      %p103 = scmp.ne.s32.totalorder %s95, %s97
      %p104 = scmp.eq.s32.totalorder %s24, 1
      %p105 = por %p103, %p104
      %p106 = scmp.ne.s32.totalorder %s97, %s98
      %p107 = scmp.eq.s32.totalorder %s24, 0
      %p108 = por %p106, %p107
      %p109 = scmp.ne.s32.totalorder %s97, %s98
      %p110 = scmp.eq.s32.totalorder %s25, 1
      %p111 = por %p109, %p110
      %p113 = scmp.ne.s32.totalorder %s98, %s112
      %p114 = scmp.eq.s32.totalorder %s25, 0
      %p115 = por %p113, %p114
      %s117 = sadd.s32 %s116, 1
      %p120 = scmp.eq.s32.totalorder %s19, 1
      %p121 = scmp.ne.s32.totalorder %s116, %s118
      %p122 = scmp.eq.s32.totalorder %s19, 0
      %p123 = por %p121, %p122
      %p124 = scmp.ne.s32.totalorder %s116, %s118
      %p125 = scmp.eq.s32.totalorder %s24, 1
      %p126 = por %p124, %p125
      %p127 = scmp.ne.s32.totalorder %s118, %s119
      %p128 = scmp.eq.s32.totalorder %s24, 0
      %p129 = por %p127, %p128
      %p130 = scmp.ne.s32.totalorder %s118, %s119
      %p131 = scmp.eq.s32.totalorder %s25, 1
      %p132 = por %p130, %p131
      %p134 = scmp.ne.s32.totalorder %s119, %s133
      %p135 = scmp.eq.s32.totalorder %s25, 0
      %p136 = por %p134, %p135
      %s138 = sadd.s32 %s137, 1
      %p141 = scmp.eq.s32.totalorder %s19, 1
      %p142 = scmp.ne.s32.totalorder %s137, %s139
      %p143 = scmp.eq.s32.totalorder %s19, 0
      %p144 = por %p142, %p143
      %p145 = scmp.ne.s32.totalorder %s137, %s139
      %p146 = scmp.eq.s32.totalorder %s24, 1
      %p147 = por %p145, %p146
      %p148 = scmp.ne.s32.totalorder %s139, %s140
      %p149 = scmp.eq.s32.totalorder %s24, 0
      %p150 = por %p148, %p149
      %p151 = scmp.ne.s32.totalorder %s139, %s140
      %p152 = scmp.eq.s32.totalorder %s25, 1
      %p153 = por %p151, %p152
      %p155 = scmp.ne.s32.totalorder %s140, %s154
      %p156 = scmp.eq.s32.totalorder %s25, 0
      %p157 = por %p155, %p156
      %s159 = sadd.s32 %s158, 1
      %p162 = scmp.eq.s32.totalorder %s19, 1
      %p163 = scmp.ne.s32.totalorder %s158, %s160
      %p164 = scmp.eq.s32.totalorder %s19, 0
      %p165 = por %p163, %p164
      %p166 = scmp.ne.s32.totalorder %s158, %s160
      %p167 = scmp.eq.s32.totalorder %s24, 1
      %p168 = por %p166, %p167
      %p169 = scmp.ne.s32.totalorder %s160, %s161
      %p170 = scmp.eq.s32.totalorder %s24, 0
      %p171 = por %p169, %p170
      %p172 = scmp.ne.s32.totalorder %s160, %s161
      %p173 = scmp.eq.s32.totalorder %s25, 1
      %p174 = por %p172, %p173
      %p176 = scmp.ne.s32.totalorder %s161, %s175
      %p177 = scmp.eq.s32.totalorder %s25, 0
      %p178 = por %p176, %p177
      %s180 = sadd.s32 %s179, 1
      %p183 = scmp.eq.s32.totalorder %s19, 1
      %p184 = scmp.ne.s32.totalorder %s179, %s181
      %p185 = scmp.eq.s32.totalorder %s19, 0
      %p186 = por %p184, %p185
      %p187 = scmp.ne.s32.totalorder %s179, %s181
      %p188 = scmp.eq.s32.totalorder %s24, 1
      %p189 = por %p187, %p188
      %p190 = scmp.ne.s32.totalorder %s181, %s182
      %p191 = scmp.eq.s32.totalorder %s24, 0
      %p192 = por %p190, %p191
      %p193 = scmp.ne.s32.totalorder %s181, %s182
      %p194 = scmp.eq.s32.totalorder %s25, 1
      %p195 = por %p193, %p194
      %p197 = scmp.ne.s32.totalorder %s182, %s196
      %p198 = scmp.eq.s32.totalorder %s25, 0
      %p199 = por %p197, %p198
      %s201 = sadd.s32 %s200, 1
      %p204 = scmp.eq.s32.totalorder %s19, 1
      %p205 = scmp.ne.s32.totalorder %s200, %s202
      %p206 = scmp.eq.s32.totalorder %s19, 0
      %p207 = por %p205, %p206
      %p208 = scmp.ne.s32.totalorder %s200, %s202
      %p209 = scmp.eq.s32.totalorder %s24, 1
      %p210 = por %p208, %p209
      %p211 = scmp.ne.s32.totalorder %s202, %s203
      %p212 = scmp.eq.s32.totalorder %s24, 0
      %p213 = por %p211, %p212
      %p214 = scmp.ne.s32.totalorder %s202, %s203
      %p215 = scmp.eq.s32.totalorder %s25, 1
      %p216 = por %p214, %p215
      %p218 = scmp.ne.s32.totalorder %s203, %s217
      %p219 = scmp.eq.s32.totalorder %s25, 0
      %p220 = por %p218, %p219
      %s221 = ssub.s32 %s19, %s26
      %p222 = scmp.eq.s32.totalorder %s221, 0
      %s224 = sadd.s32 %s223, 1
      %s225 = scalar_select %p222, %s223, %s224
      %p228 = pneg %p222
      %p229 = scmp.eq.s32.totalorder %s19, 1
      %p230 = por %p228, %p229
      %p231 = scmp.ne.s32.totalorder %s223, %s226
      %p232 = scmp.eq.s32.totalorder %s19, 0
      %p233 = por %p231, %p232
      %p234 = scmp.ne.s32.totalorder %s223, %s226
      %p235 = scmp.eq.s32.totalorder %s24, 1
      %p236 = por %p234, %p235
      %p237 = scmp.ne.s32.totalorder %s226, %s227
      %p238 = scmp.eq.s32.totalorder %s24, 0
      %p239 = por %p237, %p238
      %p240 = scmp.ne.s32.totalorder %s226, %s227
      %p241 = scmp.eq.s32.totalorder %s25, 1
      %p242 = por %p240, %p241
      %p244 = scmp.ne.s32.totalorder %s227, %s243
      %p245 = scmp.eq.s32.totalorder %s25, 0
      %p246 = por %p244, %p245
      %p247 = scmp.le.s32.totalorder 1, %s19
      %p248 = scmp.lt.s32.totalorder %s19, 3
      %p249 = pnand %p247, %p248
      %p250 = pneg %p249
      // Predicated region
      $region9: #{tpu_custom_call.1} parent=5 // pred_check
        _
      $region10: #{tpu_custom_call.1} parent=5 // pred_check_branch
        %252 = sbr.rel (%p249) target = $region12
      $region11: #{tpu_custom_call.1} parent=5 // pred_region
        %s253 = ssub.s32 %s19, 1
        // Predicated region
        $region13: #{tpu_custom_call.1} parent=11 // pred_check
          %p254 = pneg %p40
        $region14: #{tpu_custom_call.1} parent=11 // pred_check_branch
          %256 = sbr.rel (%p254) target = $region16
        $region15: #{tpu_custom_call.1} parent=11 // pred_region
          %258 = vsyncadd [#allocation4], 0
          %s260 = sshll.u32 %s0, 4
          %s261 = int_to_ptr.vmem [resolvable:$true] %s260
          %263 = dma.vmem_to_smem %s261, 16, [#allocation2], [#allocation4]
        $region16: #{tpu_custom_call.1} parent=11 // pred_fallthru
          _
        // Predicated region
        $region17: #{tpu_custom_call.1} parent=11 // pred_check
          %p264 = pneg %p87
        $region18: #{tpu_custom_call.1} parent=11 // pred_check_branch
          %266 = sbr.rel (%p264) target = $region20
        $region19: #{tpu_custom_call.1} parent=11 // pred_region
          _
        $region20: #{tpu_custom_call.1} parent=11 // pred_fallthru
          _
        // Predicated region
        $region21: #{tpu_custom_call.1} parent=11 // pred_check
          %p267 = pneg %p108
        $region22: #{tpu_custom_call.1} parent=11 // pred_check_branch
          %269 = sbr.rel (%p267) target = $region24
        $region23: #{tpu_custom_call.1} parent=11 // pred_region
          _
        $region24: #{tpu_custom_call.1} parent=11 // pred_fallthru
          _
        // Predicated region
        $region25: #{tpu_custom_call.1} parent=11 // pred_check
          %p270 = pneg %p129
        $region26: #{tpu_custom_call.1} parent=11 // pred_check_branch
          %272 = sbr.rel (%p270) target = $region28
        $region27: #{tpu_custom_call.1} parent=11 // pred_region
          _
        $region28: #{tpu_custom_call.1} parent=11 // pred_fallthru
          _
        // Predicated region
        $region29: #{tpu_custom_call.1} parent=11 // pred_check
          %p273 = pneg %p150
        $region30: #{tpu_custom_call.1} parent=11 // pred_check_branch
          %275 = sbr.rel (%p273) target = $region32
        $region31: #{tpu_custom_call.1} parent=11 // pred_region
          _
        $region32: #{tpu_custom_call.1} parent=11 // pred_fallthru
          _
        // Predicated region
        $region33: #{tpu_custom_call.1} parent=11 // pred_check
          %p276 = pneg %p171
        $region34: #{tpu_custom_call.1} parent=11 // pred_check_branch
          %278 = sbr.rel (%p276) target = $region36
        $region35: #{tpu_custom_call.1} parent=11 // pred_region
          _
        $region36: #{tpu_custom_call.1} parent=11 // pred_fallthru
          _
        // Predicated region
        $region37: #{tpu_custom_call.1} parent=11 // pred_check
          %p279 = pneg %p192
        $region38: #{tpu_custom_call.1} parent=11 // pred_check_branch
          %281 = sbr.rel (%p279) target = $region40
        $region39: #{tpu_custom_call.1} parent=11 // pred_region
          _
        $region40: #{tpu_custom_call.1} parent=11 // pred_fallthru
          _
        // Predicated region
        $region41: #{tpu_custom_call.1} parent=11 // pred_check
          %p282 = pneg %p213
        $region42: #{tpu_custom_call.1} parent=11 // pred_check_branch
          %284 = sbr.rel (%p282) target = $region44
        $region43: #{tpu_custom_call.1} parent=11 // pred_region
          _
        $region44: #{tpu_custom_call.1} parent=11 // pred_fallthru
          _
      $region12: #{tpu_custom_call.1} parent=5 // pred_fallthru
        _
      %p285 = scmp.lt.s32.totalorder %s19, 2
      // Predicated region
      $region45: #{tpu_custom_call.1} parent=5 // pred_check
        %p286 = pneg %p285
      $region46: #{tpu_custom_call.1} parent=5 // pred_check_branch
        %288 = sbr.rel (%p286) target = $region48
      $region47: #{tpu_custom_call.1} parent=5 // pred_region
        // Predicated region
        $region49: #{tpu_custom_call.1} parent=47 // pred_check
          %p289 = pneg %p60
        $region50: #{tpu_custom_call.1} parent=47 // pred_check_branch
          %291 = sbr.rel (%p289) target = $region52
        $region51: #{tpu_custom_call.1} parent=47 // pred_region
          %s292 = smul.u32 16, %s19
          %s293 = ssub.s32 25, %s292
          %p294 = scmp.lt.s32.totalorder %s293, 16
          %s295 = scalar_select %p294, %s293, 16
          %s296 = smul.u32 8, %s295
          %p297 = scmp.lt.s32.totalorder %s292, 24
          %s298 = scalar_select %p297, %s292, 24
          %s299 = smul.addr %s298, 8
          %s300 = scalar_lea.vmem %s1, %s299
          %s301 = smul.u32 16, %s19
          %s302 = ssub.s32 25, %s301
          %p303 = scmp.lt.s32.totalorder %s302, 16
          %s304 = scalar_select %p303, %s302, 16
          %s305 = smul.u32 8, %s304
        $region52: #{tpu_custom_call.1} parent=47 // pred_fallthru
          _
      $region48: #{tpu_custom_call.1} parent=5 // pred_fallthru
        _
      %p306 = scmp.le.s32.totalorder 1, %s19
      %p307 = scmp.lt.s32.totalorder %s19, 3
      %p308 = pnand %p306, %p307
      %p309 = pneg %p308
      // Predicated region
      $region53: #{tpu_custom_call.1} parent=5 // pred_check
        _
      $region54: #{tpu_custom_call.1} parent=5 // pred_check_branch
        %311 = sbr.rel (%p308) target = $region56
      $region55: #{tpu_custom_call.1} parent=5 // pred_region
        %s312 = ssub.s32 %s19, 1
        // Predicated region
        $region57: #{tpu_custom_call.1} parent=55 // pred_check
          %p313 = pneg %p40
        $region58: #{tpu_custom_call.1} parent=55 // pred_check_branch
          %315 = sbr.rel (%p313) target = $region60
        $region59: #{tpu_custom_call.1} parent=55 // pred_region
          %317 = dma.done [#allocation4], 16
        $region60: #{tpu_custom_call.1} parent=55 // pred_fallthru
          _
        %318 = sfence
        %p319 = pneg %p40
        %p320 = pneg %p37
        %s321 = smul.u32 16, %s24
        %s322 = ssub.s32 25, %s321
        %p323 = scmp.lt.s32.totalorder %s322, 16
        %s324 = scalar_select %p323, %s322, 16
        %s325 = smul.u32 8, %s324
        %p326 = scmp.lt.s32.totalorder %s321, 24
        %s327 = scalar_select %p326, %s321, 24
        %s328 = smul.addr %s327, 8
        %s329 = scalar_lea.vmem %s1, %s328
        %p330 = pneg %p66
        %p331 = pneg %p63
        %p332 = pneg %p87
        %p333 = pneg %p84
        %p334 = pneg %p108
        %p335 = pneg %p105
        %p336 = pneg %p129
        %p337 = pneg %p126
        %p338 = pneg %p150
        %p339 = pneg %p147
        %p340 = pneg %p171
        %p341 = pneg %p168
        %p342 = pneg %p192
        %p343 = pneg %p189
        %p344 = pneg %p213
        %p345 = pneg %p210
        %p346 = pneg %p239
        %p347 = pneg %p236
        %s348 = sand.u32 %s226, 1
        %s349 = scalar_lea.sflag [#allocation3], %s348
        %s350 = sand.u32 %s226, 1
        %s351 = scalar_lea.vmem [#allocation5], %s350
        %s352 = smul.u32 16, %s24
        %s353 = ssub.s32 25, %s352
        %p354 = scmp.lt.s32.totalorder %s353, 16
        %s355 = scalar_select %p354, %s353, 16
        %s356 = smul.u32 8, %s355
        %p357 = scmp.lt.s32.totalorder %s352, 24
        %s358 = scalar_select %p357, %s352, 24
        %s359 = smul.addr %s358, 8
        %s360 = scalar_lea.vmem %s1, %s359
        %s361 = smul.u32 16, %s24
        %s362 = ssub.s32 25, %s361
        %p363 = scmp.lt.s32.totalorder %s362, 16
        %s364 = scalar_select %p363, %s362, 16
        %s365 = smul.u32 8, %s364
        %s367 = sld [smem:[#allocation2]]
        %s368 = sld [smem:[#allocation2 + $0x1]]
        %s369 = sld [smem:[#allocation2 + $0x2]]
        %s370 = sld [smem:[#allocation2 + $0x3]]
        %v371 = vld [vmem:[%s7] sm:$0xff]
        %v372 = vld [vmem:[%s7 + $0x8] sm:$0xff]
        %v373 = vld [vmem:[%s7 + $0x10] sm:$0xff]
        %v374 = vld [vmem:[%s7 + $0x18] sm:$0xff]
        %v375 = vld [vmem:[%s360] sm:$0xff]
        %v376 = vld [vmem:[%s360 + $0x8] sm:$0xff]
        %v377 = vld [vmem:[%s360 + $0x10] sm:$0xff]
        %v378 = vld [vmem:[%s360 + $0x18] sm:$0xff]
        %v379 = vld [vmem:[%s360 + $0x20] sm:$0xff]
        %v380 = vld [vmem:[%s360 + $0x28] sm:$0xff]
        %v381 = vld [vmem:[%s360 + $0x30] sm:$0xff]
        %v382 = vld [vmem:[%s360 + $0x38] sm:$0xff]
        %v383 = vld [vmem:[%s360 + $0x40] sm:$0xff]
        %v384 = vld [vmem:[%s360 + $0x48] sm:$0xff]
        %v385 = vld [vmem:[%s360 + $0x50] sm:$0xff]
        %v386 = vld [vmem:[%s360 + $0x58] sm:$0xff]
        %v387 = vld [vmem:[%s360 + $0x60] sm:$0xff]
        %v388 = vld [vmem:[%s360 + $0x68] sm:$0xff]
        %v389 = vld [vmem:[%s360 + $0x70] sm:$0xff]
        %v390 = vld [vmem:[%s360 + $0x78] sm:$0xff]
        %v391 = vpack.c.bf16 %v376, %v375
        %v392 = vpack.c.bf16 %v378, %v377
        %v393 = vpack.c.bf16 %v380, %v379
        %v394 = vpack.c.bf16 %v382, %v381
        %v395 = vpack.c.bf16 %v384, %v383
        %v396 = vpack.c.bf16 %v386, %v385
        %v397 = vpack.c.bf16 %v388, %v387
        %v398 = vpack.c.bf16 %v390, %v389
        %v399 = vld [vmem:[%s2] sm:$0xf]
        %v400 = vld [vmem:[%s2 + $0x4] sm:$0xf]
        %v401 = vld [vmem:[%s2 + $0x8] sm:$0xf]
        %v402 = vld [vmem:[%s2 + $0xc] sm:$0xf]
        %404 = vset.pattern.permute.xlu0 0
        %405 = vperm.xlu0 %404, %v371
        %v406 = vpop.permute.xlu0 %405
        %409 = vset.pattern.permute.xlu0 0
        %410 = vperm.xlu0 %409, %v372
        %v411 = vpop.permute.xlu0 %410
        %414 = vset.pattern.permute.xlu0 0
        %415 = vperm.xlu0 %414, %v373
        %v416 = vpop.permute.xlu0 %415
        %419 = vset.pattern.permute.xlu0 0
        %420 = vperm.xlu0 %419, %v374
        %v421 = vpop.permute.xlu0 %420
        %v427 = vunpack.c.l.b16 %v399
        %v428 = vunpack.c.l.b16 %v400
        %v429 = vunpack.c.l.b16 %v401
        %v430 = vunpack.c.l.b16 %v402
        %v431 = vpack.c.b16 %v428, %v427
        %v432 = vpack.c.b16 %v430, %v429
        %vm433 = vcmask 261120
        %v435 = vsel %vm433, %v431, 0
        %v438 = vsel %vm433, %v432, 0
        %v441 = vsel %vm433, %v391, 0
        %v444 = vsel %vm433, %v392, 0
        %v447 = vsel %vm433, %v393, 0
        %v450 = vsel %vm433, %v394, 0
        %v453 = vsel %vm433, %v395, 0
        %v456 = vsel %vm433, %v396, 0
        %v459 = vsel %vm433, %v397, 0
        %v462 = vsel %vm433, %v398, 0
        %464 = vmatpush.bf16.xpose.msra.mxu0 %v462
        %465 = vmatpush.bf16.xpose.msra.mxu0 %v459
        %466 = vmatpush.bf16.xpose.msra.mxu0 %v456
        %467 = vmatpush.bf16.xpose.msra.mxu0 %v453
        %468 = vmatpush.bf16.xpose.msra.mxu0 %v450
        %469 = vmatpush.bf16.xpose.msra.mxu0 %v447
        %470 = vmatpush.bf16.xpose.msra.mxu0 %v444
        %471 = vmatpush.bf16.xpose.msra.mxu0 %v441
        %472 = vmatmul.bf16.gmra.mxu0 %v435
        %v473 = vpop.f32.mrf.mxu0
        %v474 = vadd.f32 %v406, %v473
        %v475 = vpop.f32.mrf.mxu0
        %v476 = vadd.f32 %v411, %v475
        %477 = vmatmul.bf16.gmra.mxu0 %v438
        %v478 = vpop.f32.mrf.mxu0
        %v479 = vadd.f32 %v416, %v478
        %v480 = vpop.f32.mrf.mxu0
        %v481 = vadd.f32 %v421, %v480
        %482 = vdwg.mxu0
        %v483 = vmul.f32 %v474, 0.5
        %v484 = vmul.f32 %v476, 0.5
        %v485 = vmul.f32 %v479, 0.5
        %v486 = vmul.f32 %v481, 0.5
        %v487 = vmul.f32 %v474, 0.044715
        %v488 = vmul.f32 %v476, 0.044715
        %v489 = vmul.f32 %v479, 0.044715
        %v490 = vmul.f32 %v481, 0.044715
        %v491 = vmul.f32 %v487, %v474
        %v492 = vmul.f32 %v488, %v476
        %v493 = vmul.f32 %v489, %v479
        %v494 = vmul.f32 %v490, %v481
        %v495 = vmul.f32 %v491, %v474
        %v496 = vmul.f32 %v492, %v476
        %v497 = vmul.f32 %v493, %v479
        %v498 = vmul.f32 %v494, %v481
        %v499 = vadd.f32 %v474, %v495
        %v500 = vadd.f32 %v476, %v496
        %v501 = vadd.f32 %v479, %v497
        %v502 = vadd.f32 %v481, %v498
        %v503 = vmul.f32 %v499, 0.7978846
        %v504 = vmul.f32 %v500, 0.7978846
        %v505 = vmul.f32 %v501, 0.7978846
        %v506 = vmul.f32 %v502, 0.7978846
        %v507 = vtanh.pop %v503
        %v508 = vtanh.pop %v504
        %v509 = vtanh.pop %v505
        %v510 = vtanh.pop %v506
        %v511 = vadd.f32 %v507, 1.0
        %v512 = vadd.f32 %v508, 1.0
        %v513 = vadd.f32 %v509, 1.0
        %v514 = vadd.f32 %v510, 1.0
        %v515 = vmul.f32 %v483, %v511
        %v516 = vmul.f32 %v484, %v512
        %v517 = vmul.f32 %v485, %v513
        %v518 = vmul.f32 %v486, %v514
        %v519 = vstv %s367
        %v520 = vmul.f32 %v519, %v515
        %v521 = vmul.f32 %v519, %v516
        %v522 = vmul.f32 %v519, %v517
        %v523 = vmul.f32 %v519, %v518
        %v524 = vtanh.pop %v520
        %v525 = vtanh.pop %v521
        %v526 = vtanh.pop %v522
        %v527 = vtanh.pop %v523
        %528 = vset.pattern.permute.xlu0 1
        %529 = vperm.xlu0 %528, %v371
        %v530 = vpop.permute.xlu0 %529
        %532 = vset.pattern.permute.xlu0 1
        %533 = vperm.xlu0 %532, %v372
        %v534 = vpop.permute.xlu0 %533
        %536 = vset.pattern.permute.xlu0 1
        %537 = vperm.xlu0 %536, %v373
        %v538 = vpop.permute.xlu0 %537
        %540 = vset.pattern.permute.xlu0 1
        %541 = vperm.xlu0 %540, %v374
        %v542 = vpop.permute.xlu0 %541
        %v544 = vmul.f32 %v524, %v530
        %v545 = vmul.f32 %v525, %v534
        %v546 = vmul.f32 %v526, %v538
        %v547 = vmul.f32 %v527, %v542
        %548 = vset.pattern.permute.xlu0 2
        %549 = vperm.xlu0 %548, %v371
        %v550 = vpop.permute.xlu0 %549
        %552 = vset.pattern.permute.xlu0 2
        %553 = vperm.xlu0 %552, %v372
        %v554 = vpop.permute.xlu0 %553
        %556 = vset.pattern.permute.xlu0 2
        %557 = vperm.xlu0 %556, %v373
        %v558 = vpop.permute.xlu0 %557
        %560 = vset.pattern.permute.xlu0 2
        %561 = vperm.xlu0 %560, %v374
        %v562 = vpop.permute.xlu0 %561
        %v564 = vadd.f32 %v544, %v550
        %v565 = vadd.f32 %v545, %v554
        %v566 = vadd.f32 %v546, %v558
        %v567 = vadd.f32 %v547, %v562
        %v568 = vpack.c.bf16 %v565, %v564
        %v569 = vpack.c.bf16 %v567, %v566
        %v570 = vld [vmem:[%s3] sm:$0xf]
        %v571 = vld [vmem:[%s3 + $0x4] sm:$0xf]
        %v572 = vld [vmem:[%s3 + $0x8] sm:$0xf]
        %v573 = vld [vmem:[%s3 + $0xc] sm:$0xf]
        %574 = vset.pattern.permute.xlu0 3
        %575 = vperm.xlu0 %574, %v371
        %v576 = vpop.permute.xlu0 %575
        %578 = vset.pattern.permute.xlu0 3
        %579 = vperm.xlu0 %578, %v372
        %v580 = vpop.permute.xlu0 %579
        %582 = vset.pattern.permute.xlu0 3
        %583 = vperm.xlu0 %582, %v373
        %v584 = vpop.permute.xlu0 %583
        %586 = vset.pattern.permute.xlu0 3
        %587 = vperm.xlu0 %586, %v374
        %v588 = vpop.permute.xlu0 %587
        %v594 = vunpack.c.l.b16 %v570
        %v595 = vunpack.c.l.b16 %v571
        %v596 = vunpack.c.l.b16 %v572
        %v597 = vunpack.c.l.b16 %v573
        %v598 = vpack.c.b16 %v595, %v594
        %v599 = vpack.c.b16 %v597, %v596
        %v601 = vsel %vm433, %v598, 0
        %v604 = vsel %vm433, %v599, 0
        %606 = vmatpush.bf16.msra.mxu0 0
        %607 = vmatpush.bf16.msra.mxu0 0
        %608 = vmatpush.bf16.msra.mxu0 0
        %609 = vmatpush.bf16.msra.mxu0 0
        %610 = vmatpush.bf16.msra.mxu0 0
        %611 = vmatpush.bf16.msra.mxu0 0
        %612 = vmatpush.bf16.msra.mxu0 %v569
        %613 = vmatpush.bf16.msra.mxu0 %v568
        %614 = vmatmul.bf16.gmra.mxu0 %v601
        %v615 = vpop.f32.mrf.mxu0
        %v616 = vadd.f32 %v576, %v615
        %v617 = vpop.f32.mrf.mxu0
        %v618 = vadd.f32 %v580, %v617
        %619 = vmatmul.bf16.gmra.mxu0 %v604
        %v620 = vpop.f32.mrf.mxu0
        %v621 = vadd.f32 %v584, %v620
        %v622 = vpop.f32.mrf.mxu0
        %v623 = vadd.f32 %v588, %v622
        %624 = vdwg.mxu0
        %v625 = vmul.f32 %v616, 0.5
        %v626 = vmul.f32 %v618, 0.5
        %v627 = vmul.f32 %v621, 0.5
        %v628 = vmul.f32 %v623, 0.5
        %v629 = vmul.f32 %v616, 0.044715
        %v630 = vmul.f32 %v618, 0.044715
        %v631 = vmul.f32 %v621, 0.044715
        %v632 = vmul.f32 %v623, 0.044715
        %v633 = vmul.f32 %v629, %v616
        %v634 = vmul.f32 %v630, %v618
        %v635 = vmul.f32 %v631, %v621
        %v636 = vmul.f32 %v632, %v623
        %v637 = vmul.f32 %v633, %v616
        %v638 = vmul.f32 %v634, %v618
        %v639 = vmul.f32 %v635, %v621
        %v640 = vmul.f32 %v636, %v623
        %v641 = vadd.f32 %v616, %v637
        %v642 = vadd.f32 %v618, %v638
        %v643 = vadd.f32 %v621, %v639
        %v644 = vadd.f32 %v623, %v640
        %v645 = vmul.f32 %v641, 0.7978846
        %v646 = vmul.f32 %v642, 0.7978846
        %v647 = vmul.f32 %v643, 0.7978846
        %v648 = vmul.f32 %v644, 0.7978846
        %v649 = vtanh.pop %v645
        %v650 = vtanh.pop %v646
        %v651 = vtanh.pop %v647
        %v652 = vtanh.pop %v648
        %v653 = vadd.f32 %v649, 1.0
        %v654 = vadd.f32 %v650, 1.0
        %v655 = vadd.f32 %v651, 1.0
        %v656 = vadd.f32 %v652, 1.0
        %v657 = vmul.f32 %v625, %v653
        %v658 = vmul.f32 %v626, %v654
        %v659 = vmul.f32 %v627, %v655
        %v660 = vmul.f32 %v628, %v656
        %v661 = vstv %s368
        %v662 = vmul.f32 %v661, %v657
        %v663 = vmul.f32 %v661, %v658
        %v664 = vmul.f32 %v661, %v659
        %v665 = vmul.f32 %v661, %v660
        %v666 = vtanh.pop %v662
        %v667 = vtanh.pop %v663
        %v668 = vtanh.pop %v664
        %v669 = vtanh.pop %v665
        %670 = vset.pattern.permute.xlu0 4
        %671 = vperm.xlu0 %670, %v371
        %v672 = vpop.permute.xlu0 %671
        %674 = vset.pattern.permute.xlu0 4
        %675 = vperm.xlu0 %674, %v372
        %v676 = vpop.permute.xlu0 %675
        %678 = vset.pattern.permute.xlu0 4
        %679 = vperm.xlu0 %678, %v373
        %v680 = vpop.permute.xlu0 %679
        %682 = vset.pattern.permute.xlu0 4
        %683 = vperm.xlu0 %682, %v374
        %v684 = vpop.permute.xlu0 %683
        %v686 = vmul.f32 %v666, %v672
        %v687 = vmul.f32 %v667, %v676
        %v688 = vmul.f32 %v668, %v680
        %v689 = vmul.f32 %v669, %v684
        %690 = vset.pattern.permute.xlu0 5
        %691 = vperm.xlu0 %690, %v371
        %v692 = vpop.permute.xlu0 %691
        %694 = vset.pattern.permute.xlu0 5
        %695 = vperm.xlu0 %694, %v372
        %v696 = vpop.permute.xlu0 %695
        %698 = vset.pattern.permute.xlu0 5
        %699 = vperm.xlu0 %698, %v373
        %v700 = vpop.permute.xlu0 %699
        %702 = vset.pattern.permute.xlu0 5
        %703 = vperm.xlu0 %702, %v374
        %v704 = vpop.permute.xlu0 %703
        %v706 = vadd.f32 %v686, %v692
        %v707 = vadd.f32 %v687, %v696
        %v708 = vadd.f32 %v688, %v700
        %v709 = vadd.f32 %v689, %v704
        %v710 = vpack.c.bf16 %v707, %v706
        %v711 = vpack.c.bf16 %v709, %v708
        %v712 = vld [vmem:[%s4] sm:$0xf]
        %v713 = vld [vmem:[%s4 + $0x4] sm:$0xf]
        %v714 = vld [vmem:[%s4 + $0x8] sm:$0xf]
        %v715 = vld [vmem:[%s4 + $0xc] sm:$0xf]
        %716 = vset.pattern.permute.xlu0 6
        %717 = vperm.xlu0 %716, %v371
        %v718 = vpop.permute.xlu0 %717
        %720 = vset.pattern.permute.xlu0 6
        %721 = vperm.xlu0 %720, %v372
        %v722 = vpop.permute.xlu0 %721
        %724 = vset.pattern.permute.xlu0 6
        %725 = vperm.xlu0 %724, %v373
        %v726 = vpop.permute.xlu0 %725
        %728 = vset.pattern.permute.xlu0 6
        %729 = vperm.xlu0 %728, %v374
        %v730 = vpop.permute.xlu0 %729
        %v736 = vunpack.c.l.b16 %v712
        %v737 = vunpack.c.l.b16 %v713
        %v738 = vunpack.c.l.b16 %v714
        %v739 = vunpack.c.l.b16 %v715
        %v740 = vpack.c.b16 %v737, %v736
        %v741 = vpack.c.b16 %v739, %v738
        %v743 = vsel %vm433, %v740, 0
        %v746 = vsel %vm433, %v741, 0
        %748 = vmatpush.bf16.msra.mxu0 0
        %749 = vmatpush.bf16.msra.mxu0 0
        %750 = vmatpush.bf16.msra.mxu0 0
        %751 = vmatpush.bf16.msra.mxu0 0
        %752 = vmatpush.bf16.msra.mxu0 0
        %753 = vmatpush.bf16.msra.mxu0 0
        %754 = vmatpush.bf16.msra.mxu0 %v711
        %755 = vmatpush.bf16.msra.mxu0 %v710
        %756 = vmatmul.bf16.gmra.mxu0 %v743
        %v757 = vpop.f32.mrf.mxu0
        %v758 = vadd.f32 %v718, %v757
        %v759 = vpop.f32.mrf.mxu0
        %v760 = vadd.f32 %v722, %v759
        %761 = vmatmul.bf16.gmra.mxu0 %v746
        %v762 = vpop.f32.mrf.mxu0
        %v763 = vadd.f32 %v726, %v762
        %v764 = vpop.f32.mrf.mxu0
        %v765 = vadd.f32 %v730, %v764
        %766 = vdwg.mxu0
        %v767 = vmul.f32 %v758, 0.5
        %v768 = vmul.f32 %v760, 0.5
        %v769 = vmul.f32 %v763, 0.5
        %v770 = vmul.f32 %v765, 0.5
        %v771 = vmul.f32 %v758, 0.044715
        %v772 = vmul.f32 %v760, 0.044715
        %v773 = vmul.f32 %v763, 0.044715
        %v774 = vmul.f32 %v765, 0.044715
        %v775 = vmul.f32 %v771, %v758
        %v776 = vmul.f32 %v772, %v760
        %v777 = vmul.f32 %v773, %v763
        %v778 = vmul.f32 %v774, %v765
        %v779 = vmul.f32 %v775, %v758
        %v780 = vmul.f32 %v776, %v760
        %v781 = vmul.f32 %v777, %v763
        %v782 = vmul.f32 %v778, %v765
        %v783 = vadd.f32 %v758, %v779
        %v784 = vadd.f32 %v760, %v780
        %v785 = vadd.f32 %v763, %v781
        %v786 = vadd.f32 %v765, %v782
        %v787 = vmul.f32 %v783, 0.7978846
        %v788 = vmul.f32 %v784, 0.7978846
        %v789 = vmul.f32 %v785, 0.7978846
        %v790 = vmul.f32 %v786, 0.7978846
        %v791 = vtanh.pop %v787
        %v792 = vtanh.pop %v788
        %v793 = vtanh.pop %v789
        %v794 = vtanh.pop %v790
        %v795 = vadd.f32 %v791, 1.0
        %v796 = vadd.f32 %v792, 1.0
        %v797 = vadd.f32 %v793, 1.0
        %v798 = vadd.f32 %v794, 1.0
        %v799 = vmul.f32 %v767, %v795
        %v800 = vmul.f32 %v768, %v796
        %v801 = vmul.f32 %v769, %v797
        %v802 = vmul.f32 %v770, %v798
        %v803 = vadd.f32 %v657, %v799
        %v804 = vadd.f32 %v658, %v800
        %v805 = vadd.f32 %v659, %v801
        %v806 = vadd.f32 %v660, %v802
        %v807 = vstv %s369
        %v808 = vmul.f32 %v807, %v803
        %v809 = vmul.f32 %v807, %v804
        %v810 = vmul.f32 %v807, %v805
        %v811 = vmul.f32 %v807, %v806
        %v812 = vtanh.pop %v808
        %v813 = vtanh.pop %v809
        %v814 = vtanh.pop %v810
        %v815 = vtanh.pop %v811
        %816 = vset.pattern.permute.xlu0 7
        %817 = vperm.xlu0 %816, %v371
        %v818 = vpop.permute.xlu0 %817
        %820 = vset.pattern.permute.xlu0 7
        %821 = vperm.xlu0 %820, %v372
        %v822 = vpop.permute.xlu0 %821
        %824 = vset.pattern.permute.xlu0 7
        %825 = vperm.xlu0 %824, %v373
        %v826 = vpop.permute.xlu0 %825
        %828 = vset.pattern.permute.xlu0 7
        %829 = vperm.xlu0 %828, %v374
        %v830 = vpop.permute.xlu0 %829
        %v832 = vmul.f32 %v812, %v818
        %v833 = vmul.f32 %v813, %v822
        %v834 = vmul.f32 %v814, %v826
        %v835 = vmul.f32 %v815, %v830
        %836 = vset.pattern.permute.xlu0 8
        %837 = vperm.xlu0 %836, %v371
        %v838 = vpop.permute.xlu0 %837
        %840 = vset.pattern.permute.xlu0 8
        %841 = vperm.xlu0 %840, %v372
        %v842 = vpop.permute.xlu0 %841
        %844 = vset.pattern.permute.xlu0 8
        %845 = vperm.xlu0 %844, %v373
        %v846 = vpop.permute.xlu0 %845
        %848 = vset.pattern.permute.xlu0 8
        %849 = vperm.xlu0 %848, %v374
        %v850 = vpop.permute.xlu0 %849
        %v852 = vadd.f32 %v832, %v838
        %v853 = vadd.f32 %v833, %v842
        %v854 = vadd.f32 %v834, %v846
        %v855 = vadd.f32 %v835, %v850
        %v856 = vpack.c.bf16 %v853, %v852
        %v857 = vpack.c.bf16 %v855, %v854
        %v858 = vld [vmem:[%s5] sm:$0xf]
        %v859 = vld [vmem:[%s5 + $0x4] sm:$0xf]
        %v860 = vld [vmem:[%s8] sm:$0xff]
        %v861 = vld [vmem:[%s8 + $0x8] sm:$0xff]
        %863 = vset.pattern.permute.xlu0 0
        %864 = vperm.xlu0 %863, %v860
        %v865 = vpop.permute.xlu0 %864
        %868 = vset.pattern.permute.xlu0 0
        %869 = vperm.xlu0 %868, %v861
        %v870 = vpop.permute.xlu0 %869
        %v874 = vunpack.c.l.b16 %v858
        %v875 = vunpack.c.l.b16 %v859
        %v876 = vpack.c.b16 %v875, %v874
        %v878 = vsel %vm433, %v876, 0
        %880 = vmatpush.bf16.msra.mxu0 0
        %881 = vmatpush.bf16.msra.mxu0 0
        %882 = vmatpush.bf16.msra.mxu0 0
        %883 = vmatpush.bf16.msra.mxu0 0
        %884 = vmatpush.bf16.msra.mxu0 0
        %885 = vmatpush.bf16.msra.mxu0 0
        %886 = vmatpush.bf16.msra.mxu0 %v857
        %887 = vmatpush.bf16.msra.mxu0 %v856
        %888 = vmatmul.bf16.gmra.mxu0 %v878
        %v889 = vpop.f32.mrf.mxu0
        %v890 = vadd.f32 %v865, %v889
        %v891 = vpop.f32.mrf.mxu0
        %v892 = vadd.f32 %v870, %v891
        %893 = vdwg.mxu0
        %v894 = vmul.f32 %v890, 0.5
        %v895 = vmul.f32 %v892, 0.5
        %v896 = vmul.f32 %v890, 0.044715
        %v897 = vmul.f32 %v892, 0.044715
        %v898 = vmul.f32 %v896, %v890
        %v899 = vmul.f32 %v897, %v892
        %v900 = vmul.f32 %v898, %v890
        %v901 = vmul.f32 %v899, %v892
        %v902 = vadd.f32 %v890, %v900
        %v903 = vadd.f32 %v892, %v901
        %v904 = vmul.f32 %v902, 0.7978846
        %v905 = vmul.f32 %v903, 0.7978846
        %v906 = vtanh.pop %v904
        %v907 = vtanh.pop %v905
        %v908 = vadd.f32 %v906, 1.0
        %v909 = vadd.f32 %v907, 1.0
        %v910 = vmul.f32 %v894, %v908
        %v911 = vmul.f32 %v895, %v909
        %v912 = vld [vmem:[%s6] sm:$0xff]
        %v913 = vld [vmem:[%s6 + $0x8] sm:$0xff]
        %915 = vset.pattern.permute.xlu0 0
        %916 = vperm.xlu0 %915, %v912
        %v917 = vpop.permute.xlu0 %916
        %920 = vset.pattern.permute.xlu0 0
        %921 = vperm.xlu0 %920, %v913
        %v922 = vpop.permute.xlu0 %921
        %v924 = vmul.f32 %v910, %v917
        %v925 = vmul.f32 %v911, %v922
        %v926 = vadd.f32 %v924, %v925
        %v927 = vrot.slane %v926, 4
        %v928 = vadd.f32 %v926, %v927
        %v929 = vrot.slane %v928, 2
        %v930 = vadd.f32 %v928, %v929
        %v931 = vrot.slane %v930, 1
        %v932 = vadd.f32 %v930, %v931
        %v933 = vstv %s370
        %v934 = vadd.f32 %v932, %v933
        %935 = vst [vmem:[%s351] sm:$0x1] %v934
        %s936 = sand.u32 %s226, 1
        %s937 = scalar_lea.sflag [#allocation3], %s936
        %s938 = sand.u32 %s226, 1
        %s939 = scalar_lea.vmem [#allocation5], %s938
        // Predicated region
        $region61: #{tpu_custom_call.1} parent=55 // pred_check
          %p940 = pneg %p236
        $region62: #{tpu_custom_call.1} parent=55 // pred_check_branch
          %942 = sbr.rel (%p940) target = $region64
        $region63: #{tpu_custom_call.1} parent=55 // pred_region
          %944 = vsyncadd %s937, 0
          %s945 = scalar_lea.hbm %s9, %s24
          %s947 = sshll.u32 %s939, 4
          %s948 = int_to_ptr.vmem [resolvable:$true] %s947
          %s949 = sshll.u32 %s945, 4
          %s950 = int_to_ptr.hbm [resolvable:$true] %s949
          %952 = dma.vmem_to_hbm [thread:$0]  %s948, 16, %s950, %s937
        $region64: #{tpu_custom_call.1} parent=55 // pred_fallthru
          _
      $region56: #{tpu_custom_call.1} parent=5 // pred_fallthru
        _
      %p953 = scmp.le.s32.totalorder 2, %s19
      // Predicated region
      $region65: #{tpu_custom_call.1} parent=5 // pred_check
        %p954 = pneg %p953
      $region66: #{tpu_custom_call.1} parent=5 // pred_check_branch
        %956 = sbr.rel (%p954) target = $region68
      $region67: #{tpu_custom_call.1} parent=5 // pred_region
        %s957 = ssub.s32 %s19, 2
        // Predicated region
        $region69: #{tpu_custom_call.1} parent=67 // pred_check
          %p958 = pneg %p242
        $region70: #{tpu_custom_call.1} parent=67 // pred_check_branch
          %960 = sbr.rel (%p958) target = $region72
        $region71: #{tpu_custom_call.1} parent=67 // pred_region
          %s961 = sand.u32 %s227, 1
          %s962 = scalar_lea.sflag [#allocation3], %s961
          %s963 = sand.u32 %s227, 1
          %s964 = scalar_lea.vmem [#allocation5], %s963
          %966 = dma.done %s962, 16
        $region72: #{tpu_custom_call.1} parent=67 // pred_fallthru
          _
      $region68: #{tpu_custom_call.1} parent=5 // pred_fallthru
        _
    $region6: #{tpu_custom_call.1} parent=1 // loop_footer
      %s23 = sadd.s32 1, %s19
    $region7: #{tpu_custom_call.1} parent=1 // loop_footer_branch
      %18 = sbr.rel target = $region3
    $region8: #{tpu_custom_call.1} parent=1 // loop_exit
      _
    %967 = vsyncpa [#allocation3], 1
    %s968 = scalar_lea.sflag [#allocation3], 1
    %969 = vsyncpa %s968, 1
    %970 = vsyncpa [#allocation4], 1
    %s971 = scalar_lea.sflag [#allocation4], 1
    %972 = vsyncpa %s971, 1

</llo_original>
